<compile_context>
chip_gen: v7x
topology: tpu7x:2x2x1
jax: 0.10.0
libtpu: 0.0.40
codegen_flags: <defaults>
</compile_context>

<pallas_src>
import functools
import math

import jax
import jax.numpy as jnp
from jax.experimental import pallas as pl
from jax.experimental.pallas import tpu as pltpu

LANE = 128


def _round_up(x: int, m: int) -> int:
    return ((x + m - 1) // m) * m


def _nbytes(shape, dtype) -> int:
    return math.prod(shape) * jnp.dtype(dtype).itemsize


def _vmem_cap_bytes() -> int:
    """Usable VMEM cap: physical capacity minus ~1/8 compiler-scratch headroom."""
    cap = 64 << 20                          # conservative default (v7x physical VMEM)
    try:
        info = pltpu.get_tpu_info()
        cap = int(getattr(info, "vmem_capacity_bytes", cap))
    except Exception:
        pass
    return (cap * 7) // 8                   # ~56 MiB on v7x, ~112 MiB on v5e/v6e


def _vmem_limit(block_bytes: int, cap: int) -> int:
    need = block_bytes + (8 << 20)          # + headroom for Mosaic internal scratch
    return int(min(max(need, 32 << 20), cap))


def _fallback_row_tile(n: int, target: int):
    """Row tile for the two-pass path: multiple of 8 (prefer 128) dividing n.
    If no suitable divisor exists, pad n up to a multiple of 128 instead."""
    t = max(8, min(target, n))
    best8 = None
    for cand in range(t, 7, -1):
        if n % cand == 0:
            if cand % 128 == 0:
                return cand, n
            if best8 is None and cand % 8 == 0:
                best8 = cand
    if best8 is not None:
        return best8, n
    n_pad = _round_up(n, LANE)
    tm = LANE
    while tm * 2 <= t and n_pad % (tm * 2) == 0:
        tm *= 2
    return tm, n_pad


# --------------------------------------------------------------------------- #
# Kernels
# --------------------------------------------------------------------------- #
def _gcn_fused_kernel(adj_ref, xw1_ref, b1_ref, w2_ref, b2_ref, o_ref, *,
                      deg_col, compute_dtype, approx_recip):
    """Whole forward for one batch element; adjacency read from HBM once."""
    adj = adj_ref[...].astype(compute_dtype)          # in-kernel VPU cast, no HBM cost
    rhs1 = xw1_ref[...].astype(compute_dtype)         # (N, Hp) = [x@W1 | ones | 0...]
    # First propagation; lane `deg_col` of the result is the row degree (free).
    agg1 = jnp.dot(adj, rhs1, preferred_element_type=jnp.float32)       # (N, Hp)
    inv_deg = pl.reciprocal(agg1[:, deg_col:deg_col + 1] + 1e-6, approx=approx_recip)
    h = jnp.maximum(agg1 * inv_deg + b1_ref[...], 0.0)                  # fc1 + ReLU
    z = jnp.dot(h, w2_ref[...], preferred_element_type=jnp.float32)     # hoisted fc2
    # Second propagation of the 128-wide projected features.
    agg2 = jnp.dot(adj, z.astype(compute_dtype), preferred_element_type=jnp.float32)
    o_ref[...] = jnp.maximum(agg2 * inv_deg + b2_ref[...], 0.0).astype(o_ref.dtype)


def _gcn_pass1_kernel(adj_ref, xw1_ref, b1_ref, w2_ref, z_ref, inv_ref, *,
                      deg_col, compute_dtype, approx_recip):
    """z = relu((adj @ [xW1|1]) * inv_deg + b1) @ W2 for one (batch, row tile);
    also emits inv_deg so pass 2 never re-reduces the adjacency."""
    adj = adj_ref[...].astype(compute_dtype)                            # (TM, N)
    agg1 = jnp.dot(adj, xw1_ref[...].astype(compute_dtype),
                   preferred_element_type=jnp.float32)                  # (TM, Hp)
    inv_deg = pl.reciprocal(agg1[:, deg_col:deg_col + 1] + 1e-6, approx=approx_recip)
    h = jnp.maximum(agg1 * inv_deg + b1_ref[...], 0.0)
    z_ref[...] = jnp.dot(h, w2_ref[...],
                         preferred_element_type=jnp.float32).astype(z_ref.dtype)
    inv_ref[...] = inv_deg


def _gcn_pass2_kernel(adj_ref, z_ref, inv_ref, b2_ref, o_ref, *, compute_dtype):
    """out = relu((adj @ z) * inv_deg + b2) for one (batch, row tile)."""
    adj = adj_ref[...].astype(compute_dtype)                            # (TM, N)
    agg2 = jnp.dot(adj, z_ref[...].astype(compute_dtype),
                   preferred_element_type=jnp.float32)                  # (TM, Dout_p)
    o_ref[...] = jnp.maximum(agg2 * inv_ref[...] + b2_ref[...], 0.0).astype(o_ref.dtype)


# --------------------------------------------------------------------------- #
# Wrapper
# --------------------------------------------------------------------------- #
def two_layer_gcn(x, adj, w1, b1, w2, b2, *, row_tile=512,
                  compute_dtype=jnp.bfloat16, force_two_pass=False):
    """Pallas TwoLayerGCN forward.  x:(B,N,Din), adj:(B,N,N) -> (B,N,Dout)."""
    B, N, Din = x.shape
    H = w1.shape[-1]
    Dout = w2.shape[-1]
    out_dtype = x.dtype
    f32 = jnp.float32

    deg_col = H                              # lane carrying the MXU-computed degree
    Hp = _round_up(H + 1, LANE)              # fc1 width + ones column, lane-dense
    Dout_p = _round_up(Dout, LANE)           # lane-dense unmasked output stores

    approx_recip = jnp.dtype(compute_dtype) != jnp.dtype(f32)
    adj_isz = jnp.dtype(adj.dtype).itemsize
    cd_isz = jnp.dtype(compute_dtype).itemsize
    out_isz = jnp.dtype(out_dtype).itemsize
    cap = _vmem_cap_bytes()

    # --- tiny O(N*128) per-call preprocessing in XLA (the O(N^2) operand untouched) ---
    xw1 = jnp.einsum("bnd,dh->bnh", x.astype(f32), w1.astype(f32))      # fc1 reorder
    xw1p = (jnp.zeros((B, N, Hp), f32)
            .at[:, :, :H].set(xw1)
            .at[:, :, deg_col].set(1.0))                                # ones -> degree
    b1p = jnp.zeros((1, Hp), f32).at[:, :H].set(b1.reshape(1, H).astype(f32))
    w2p = jnp.zeros((Hp, Dout_p), f32).at[:H, :Dout].set(w2.astype(f32))  # row deg_col = 0
    b2p = jnp.zeros((1, Dout_p), f32).at[:, :Dout].set(b2.reshape(1, Dout).astype(f32))

    # ---------------- fused single-kernel path (adjacency read once) ----------------
    fused_bytes = (2 * _nbytes((N, N), adj.dtype)            # adj block, double-buffered
                   + _nbytes((N, N), compute_dtype)          # in-kernel low-precision copy
                   + 3 * _nbytes((N, Hp), f32)               # xw1p blocks + agg1/h
                   + 2 * _nbytes((N, Dout_p), f32)           # z + agg2
                   + 2 * _nbytes((N, Dout_p), out_dtype)     # output block, double-buffered
                   + _nbytes((Hp, Dout_p), f32) + _nbytes((1, Hp), f32)
                   + _nbytes((1, Dout_p), f32))
    if not force_two_pass and fused_bytes + (8 << 20) <= cap:
        # TODO(synk): with B == 1 on v7x this single-step grid uses one TensorCore;
        # a balanced split would need a cross-core exchange of z.
        kern = functools.partial(_gcn_fused_kernel, deg_col=deg_col,
                                 compute_dtype=compute_dtype, approx_recip=approx_recip)
        out_p = pl.pallas_call(
            kern,
            out_shape=jax.ShapeDtypeStruct((B, N, Dout_p), out_dtype),
            grid=(B,),
            in_specs=[
                pl.BlockSpec((None, N, N), lambda b: (b, 0, 0)),      # adjacency (native f32)
                pl.BlockSpec((None, N, Hp), lambda b: (b, 0, 0)),     # [x@W1 | ones]
                pl.BlockSpec((1, Hp), lambda b: (0, 0)),              # b1 (padded)
                pl.BlockSpec((Hp, Dout_p), lambda b: (0, 0)),         # W2 (padded)
                pl.BlockSpec((1, Dout_p), lambda b: (0, 0)),          # b2 (padded)
            ],
            out_specs=pl.BlockSpec((None, N, Dout_p), lambda b: (b, 0, 0)),
            compiler_params=pltpu.CompilerParams(
                dimension_semantics=("parallel",),
                vmem_limit_bytes=_vmem_limit(fused_bytes, cap),
            ),
        )(adj, xw1p, b1p, w2p, b2p)
        return out_p[:, :, :Dout]

    # ---------------- large-N fallback: two row-tiled passes ----------------
    per_row = N * (2 * adj_isz + cd_isz)                     # dominant per-output-row bytes
    tm_budget = max(8, int((cap - (16 << 20)) // max(per_row, 1)) // 8 * 8)
    TM, Np = _fallback_row_tile(N, max(8, min(row_tile, tm_budget)))
    n_tiles = Np // TM

    adj_in, xw1_in = adj, xw1p
    if Np != N:   # zero rows/cols are inert: they add nothing to deg or either matmul
        adj_in = jnp.zeros((B, Np, Np), adj.dtype).at[:, :N, :N].set(adj)
        xw1_in = jnp.zeros((B, Np, Hp), f32).at[:, :N, :].set(xw1p)

    pass1_bytes = (2 * TM * Np * adj_isz + TM * Np * cd_isz
                   + 2 * Np * Hp * 4 + Np * Hp * cd_isz
                   + 3 * TM * Hp * 4
                   + Hp * Dout_p * 4 + Hp * 4
                   + 2 * TM * Dout_p * cd_isz + 2 * TM * 4)
    kern1 = functools.partial(_gcn_pass1_kernel, deg_col=deg_col,
                              compute_dtype=compute_dtype, approx_recip=approx_recip)
    z, inv_deg = pl.pallas_call(
        kern1,
        out_shape=(jax.ShapeDtypeStruct((B, Np, Dout_p), compute_dtype),
                   jax.ShapeDtypeStruct((B, Np, 1), jnp.float32)),
        grid=(B, n_tiles),
        in_specs=[
            pl.BlockSpec((None, TM, Np), lambda b, i: (b, i, 0)),     # adj row tile (f32)
            pl.BlockSpec((None, Np, Hp), lambda b, i: (b, 0, 0)),     # [x@W1|1], resident per batch
            pl.BlockSpec((1, Hp), lambda b, i: (0, 0)),
            pl.BlockSpec((Hp, Dout_p), lambda b, i: (0, 0)),
        ],
        out_specs=(pl.BlockSpec((None, TM, Dout_p), lambda b, i: (b, i, 0)),
                   pl.BlockSpec((None, TM, 1), lambda b, i: (b, i, 0))),
        compiler_params=pltpu.CompilerParams(
            dimension_semantics=("parallel", "parallel"),
            vmem_limit_bytes=_vmem_limit(pass1_bytes, cap),
        ),
    )(adj_in, xw1_in, b1p, w2p)

    pass2_bytes = (2 * TM * Np * adj_isz + TM * Np * cd_isz
                   + 3 * Np * Dout_p * cd_isz
                   + 2 * TM * 4 + Dout_p * 4
                   + 2 * TM * Dout_p * 4 + 2 * TM * Dout_p * out_isz)
    kern2 = functools.partial(_gcn_pass2_kernel, compute_dtype=compute_dtype)
    out_p = pl.pallas_call(
        kern2,
        out_shape=jax.ShapeDtypeStruct((B, Np, Dout_p), out_dtype),
        grid=(B, n_tiles),
        in_specs=[
            pl.BlockSpec((None, TM, Np), lambda b, i: (b, i, 0)),     # adj row tile
            pl.BlockSpec((None, Np, Dout_p), lambda b, i: (b, 0, 0)), # projected features z
            pl.BlockSpec((None, TM, 1), lambda b, i: (b, i, 0)),      # inv_deg from pass 1
            pl.BlockSpec((1, Dout_p), lambda b, i: (0, 0)),
        ],
        out_specs=pl.BlockSpec((None, TM, Dout_p), lambda b, i: (b, i, 0)),
        compiler_params=pltpu.CompilerParams(
            dimension_semantics=("parallel", "parallel"),
            vmem_limit_bytes=_vmem_limit(pass2_bytes, cap),
        ),
    )(adj_in, z, inv_deg, b2p)

    return out_p[:, :N, :Dout]


def reference_gcn(x, adj, w1, b1, w2, b2):
    """Pure-JAX f32 mirror of the PyTorch forward."""
    deg = jnp.sum(adj, axis=2, keepdims=True)
    na = adj / (deg + 1e-6)
    h = jnp.einsum("bnm,bmd->bnd", na, x)
    h = jnp.maximum(h @ w1 + b1, 0.0)
    h = jnp.einsum("bnm,bmd->bnd", na, h)
    h = jnp.maximum(h @ w2 + b2, 0.0)
    return h


if __name__ == "__main__":
    B, N = 2, 16
    input_dim, hidden_dim, output_dim = 8, 32, 16

    key = jax.random.PRNGKey(0)
    k_x, k_a, k_w1, k_b1, k_w2, k_b2 = jax.random.split(key, 6)

    x = jax.random.normal(k_x, (B, N, input_dim), dtype=jnp.float32)
    adj = jax.random.uniform(k_a, (B, N, N), dtype=jnp.float32)

    # deterministic parameters mimicking nn.Linear's U(-1/sqrt(fan_in), .) init;
    # weights are stored pre-transposed as (in_dim, out_dim) so kernels do x @ W + b.
    bound1 = 1.0 / (input_dim ** 0.5)
    w1 = jax.random.uniform(k_w1, (input_dim, hidden_dim), jnp.float32, -bound1, bound1)
    b1 = jax.random.uniform(k_b1, (1, hidden_dim), jnp.float32, -bound1, bound1)
    bound2 = 1.0 / (hidden_dim ** 0.5)
    w2 = jax.random.uniform(k_w2, (hidden_dim, output_dim), jnp.float32, -bound2, bound2)
    b2 = jax.random.uniform(k_b2, (1, output_dim), jnp.float32, -bound2, bound2)

    ref = reference_gcn(x, adj, w1, b1, w2, b2)

    # exact-dtype path (f32 operands, exact reciprocal): isolates semantics
    out_f32 = jax.block_until_ready(
        two_layer_gcn(x, adj, w1, b1, w2, b2, compute_dtype=jnp.float32))
    assert out_f32.shape == (B, N, output_dim)
    assert jnp.allclose(out_f32, ref, atol=2e-2, rtol=2e-2), \
        float(jnp.max(jnp.abs(out_f32 - ref)))

    # default fast (fused) path: in-kernel bf16 operands, f32 MXU accumulation
    out = jax.block_until_ready(two_layer_gcn(x, adj, w1, b1, w2, b2))
    assert out.shape == (B, N, output_dim)
    assert jnp.allclose(out, ref, atol=5e-2, rtol=5e-2), \
        float(jnp.max(jnp.abs(out - ref)))

    # large-N fallback (two row-tiled passes) exercised at small shapes for coverage
    out_2p = jax.block_until_ready(
        two_layer_gcn(x, adj, w1, b1, w2, b2, force_two_pass=True))
    assert out_2p.shape == (B, N, output_dim)
    assert jnp.allclose(out_2p, ref, atol=5e-2, rtol=5e-2), \
        float(jnp.max(jnp.abs(out_2p - ref)))

    print("KERNEL_OK")
</pallas_src>

<mosaic_0001>
module attributes {stable_mosaic.version = 11 : i64} {
  func.func @_gcn_fused_kernel(%arg0: i32, %arg1: memref<1x16x16xf32, #tpu.memory_space<vmem>>, %arg2: memref<1x16x128xf32, #tpu.memory_space<vmem>>, %arg3: memref<1x128xf32, #tpu.memory_space<vmem>>, %arg4: memref<128x128xf32, #tpu.memory_space<vmem>>, %arg5: memref<1x128xf32, #tpu.memory_space<vmem>>, %arg6: memref<1x16x128xf32, #tpu.memory_space<vmem>>) attributes {dimension_semantics = [#tpu.dimension_semantics<parallel>], iteration_bounds = array<i64: 2>, scalar_prefetch = 0 : i64, scratch_operands = 0 : i64, tpu.core_type = #tpu.core_type<tc>, window_params = [{transform_indices = @transform_0, window_bounds = array<i64: 1, 16, 16>}, {transform_indices = @transform_1, window_bounds = array<i64: 1, 16, 128>}, {pipeline_mode = #tpu.pipeline_mode<synchronous>, transform_indices = @transform_2, window_bounds = array<i64: 1, 128>}, {pipeline_mode = #tpu.pipeline_mode<synchronous>, transform_indices = @transform_3, window_bounds = array<i64: 128, 128>}, {pipeline_mode = #tpu.pipeline_mode<synchronous>, transform_indices = @transform_4, window_bounds = array<i64: 1, 128>}, {transform_indices = @transform_5, window_bounds = array<i64: 1, 16, 128>}]} {
    %c0 = arith.constant 0 : index
    %c0_0 = arith.constant 0 : index
    %c0_1 = arith.constant 0 : index
    %0 = vector.load %arg1[%c0, %c0_0, %c0_1] : memref<1x16x16xf32, #tpu.memory_space<vmem>>, vector<1x16x16xf32>
    %1 = vector.shape_cast %0 : vector<1x16x16xf32> to vector<16x16xf32>
    %c0_2 = arith.constant 0 : index
    %c0_3 = arith.constant 0 : index
    %c0_4 = arith.constant 0 : index
    %2 = vector.load %arg2[%c0_2, %c0_3, %c0_4] : memref<1x16x128xf32, #tpu.memory_space<vmem>>, vector<1x16x128xf32>
    %3 = vector.shape_cast %2 : vector<1x16x128xf32> to vector<16x128xf32>
    %cst = arith.constant dense<0.000000e+00> : vector<16x128xf32>
    %4 = tpu.matmul %1, %3, %cst {dimension_numbers = #tpu.dot_dimension_numbers<[1], [0], [0], [1], [0, 0, 1, 1], [], []>} : vector<16x16xf32>, vector<16x128xf32>, vector<16x128xf32> -> vector<16x128xf32>
    %5 = vector.extract_strided_slice %4 {offsets = [0, 32], sizes = [16, 1], strides = [1, 1]} : vector<16x128xf32> to vector<16x1xf32>
    %cst_5 = arith.constant 9.99999997E-7 : f32
    %6 = vector.broadcast %cst_5 : f32 to vector<16x1xf32>
    %7 = arith.addf %5, %6 : vector<16x1xf32>
    %8 = tpu.reciprocal %7 : vector<16x1xf32> -> vector<16x1xf32>
    %9 = vector.broadcast %8 : vector<16x1xf32> to vector<16x128xf32>
    %10 = arith.mulf %4, %9 : vector<16x128xf32>
    %c0_6 = arith.constant 0 : index
    %c0_7 = arith.constant 0 : index
    %11 = vector.load %arg3[%c0_6, %c0_7] : memref<1x128xf32, #tpu.memory_space<vmem>>, vector<1x128xf32>
    %12 = vector.broadcast %11 : vector<1x128xf32> to vector<16x128xf32>
    %13 = arith.addf %10, %12 : vector<16x128xf32>
    %cst_8 = arith.constant 0.000000e+00 : f32
    %14 = vector.broadcast %cst_8 : f32 to vector<16x128xf32>
    %15 = arith.maximumf %13, %14 : vector<16x128xf32>
    %c0_9 = arith.constant 0 : index
    %c0_10 = arith.constant 0 : index
    %16 = vector.load %arg4[%c0_9, %c0_10] : memref<128x128xf32, #tpu.memory_space<vmem>>, vector<128x128xf32>
    %cst_11 = arith.constant dense<0.000000e+00> : vector<16x128xf32>
    %17 = tpu.matmul %15, %16, %cst_11 {dimension_numbers = #tpu.dot_dimension_numbers<[1], [0], [0], [1], [0, 0, 1, 1], [], []>} : vector<16x128xf32>, vector<128x128xf32>, vector<16x128xf32> -> vector<16x128xf32>
    %cst_12 = arith.constant dense<0.000000e+00> : vector<16x128xf32>
    %18 = tpu.matmul %1, %17, %cst_12 {dimension_numbers = #tpu.dot_dimension_numbers<[1], [0], [0], [1], [0, 0, 1, 1], [], []>} : vector<16x16xf32>, vector<16x128xf32>, vector<16x128xf32> -> vector<16x128xf32>
    %19 = vector.broadcast %8 : vector<16x1xf32> to vector<16x128xf32>
    %20 = arith.mulf %18, %19 : vector<16x128xf32>
    %c0_13 = arith.constant 0 : index
    %c0_14 = arith.constant 0 : index
    %21 = vector.load %arg5[%c0_13, %c0_14] : memref<1x128xf32, #tpu.memory_space<vmem>>, vector<1x128xf32>
    %22 = vector.broadcast %21 : vector<1x128xf32> to vector<16x128xf32>
    %23 = arith.addf %20, %22 : vector<16x128xf32>
    %cst_15 = arith.constant 0.000000e+00 : f32
    %24 = vector.broadcast %cst_15 : f32 to vector<16x128xf32>
    %25 = arith.maximumf %23, %24 : vector<16x128xf32>
    %c0_16 = arith.constant 0 : index
    %c0_17 = arith.constant 0 : index
    %c0_18 = arith.constant 0 : index
    %26 = vector.load %arg6[%c0_16, %c0_17, %c0_18] : memref<1x16x128xf32, #tpu.memory_space<vmem>>, vector<1x16x128xf32>
    %27 = vector.shape_cast %26 : vector<1x16x128xf32> to vector<16x128xf32>
    %28 = vector.shape_cast %25 : vector<16x128xf32> to vector<1x16x128xf32>
    tpu.vector_store %arg6[%c0_16, %c0_17, %c0_18], %28 {strides = array<i32>} : memref<1x16x128xf32, #tpu.memory_space<vmem>>, vector<1x16x128xf32>,
    return
  }
  func.func @transform_0(%arg0: i32) -> (i32, i32, i32) {
    %c0_i32 = arith.constant 0 : i32
    %c0_i32_0 = arith.constant 0 : i32
    %c0_i32_1 = arith.constant 0 : i32
    return %arg0, %c0_i32, %c0_i32_0 : i32, i32, i32
  }
  func.func @transform_1(%arg0: i32) -> (i32, i32, i32) {
    %c0_i32 = arith.constant 0 : i32
    %c0_i32_0 = arith.constant 0 : i32
    %c0_i32_1 = arith.constant 0 : i32
    return %arg0, %c0_i32, %c0_i32_0 : i32, i32, i32
  }
  func.func @transform_2(%arg0: i32) -> (i32, i32) {
    %c0_i32 = arith.constant 0 : i32
    %c0_i32_0 = arith.constant 0 : i32
    %c0_i32_1 = arith.constant 0 : i32
    return %c0_i32, %c0_i32_0 : i32, i32
  }
  func.func @transform_3(%arg0: i32) -> (i32, i32) {
    %c0_i32 = arith.constant 0 : i32
    %c0_i32_0 = arith.constant 0 : i32
    %c0_i32_1 = arith.constant 0 : i32
    return %c0_i32, %c0_i32_0 : i32, i32
  }
  func.func @transform_4(%arg0: i32) -> (i32, i32) {
    %c0_i32 = arith.constant 0 : i32
    %c0_i32_0 = arith.constant 0 : i32
    %c0_i32_1 = arith.constant 0 : i32
    return %c0_i32, %c0_i32_0 : i32, i32
  }
  func.func @transform_5(%arg0: i32) -> (i32, i32, i32) {
    %c0_i32 = arith.constant 0 : i32
    %c0_i32_0 = arith.constant 0 : i32
    %c0_i32_1 = arith.constant 0 : i32
    return %arg0, %c0_i32, %c0_i32_0 : i32, i32, i32
  }
}

</mosaic_0001>

<llo_original>
// kernel: tpu_custom_call.1
$region0: #{tpu_custom_call.1}
  #allocation0 [shape = 'u32[]', space=smem, size = 0x4, offset = 0x4, fixed_abs, tag = 'smem constant byte address 0x4 - core index']
  #allocation1 [shape = 'u32[144,128]{1,0:T(1,128)}', space=vmem, size = 0x12000, scoped, tag = 'internal scratch']
  %s0 = inlined_call_operand.hbm [shape: f32[2,16,16], index: 0, kind: input, shape index: {}]
  %s1 = inlined_call_operand.hbm [shape: f32[2,16,128], index: 1, kind: input, shape index: {}]
  %s2 = inlined_call_operand.vmem [shape: f32[1,128], index: 2, kind: input, shape index: {}]
  %s3 = inlined_call_operand.hbm [shape: f32[128,128], index: 3, kind: input, shape index: {}]
  %s4 = inlined_call_operand.vmem [shape: f32[1,128], index: 4, kind: input, shape index: {}]
  %s5 = inlined_call_operand.hbm [shape: f32[2,16,128], index: 5, kind: output, shape index: {}]
  %s6 = sld [smem:[#allocation0]]
  $region65: #{tpu_custom_call.1} parent=0
    _
  %s8 = ssub.s32 1, %s6
  %s9 = scalar_select 0, %s8, %s6
  $region1: #{tpu_custom_call.1} parent=0
    #allocation2 [shape = 'u8[16384]{0}', space=vmem, size = 0x4000, scoped, tag = 'input window, operand 0']
    #allocation3 [shape = 's32[2]{0}', space=sflag, size = 0x8, scoped, tag = 'scoped memory for tpu_custom_call.1']
    #allocation4 [shape = 's32[2]{0}', space=sflag, size = 0x8, scoped, tag = 'scoped memory for tpu_custom_call.1']
    #allocation5 [shape = 'u8[16384]{0}', space=vmem, size = 0x4000, scoped, tag = 'input window, operand 1']
    #allocation6 [shape = 's32[2]{0}', space=sflag, size = 0x8, scoped, tag = 'scoped memory for tpu_custom_call.1']
    #allocation7 [shape = 'u8[65536]{0}', space=vmem, size = 0x10000, scoped, tag = 'input window, operand 3, single buffered']
    #allocation8 [shape = 'u8[16384]{0}', space=vmem, size = 0x4000, scoped, tag = 'output window, operand 0']
    %10 = vsyncpa [#allocation3], 0
    %s11 = scalar_lea.sflag [#allocation3], 1
    %12 = vsyncpa %s11, 0
    %13 = vsyncpa [#allocation6], 0
    %s14 = scalar_lea.sflag [#allocation6], 1
    %15 = vsyncpa %s14, 0
    %16 = vsyncpa [#allocation4], 0
    %s17 = scalar_lea.sflag [#allocation4], 1
    %18 = vsyncpa %s17, 0
    loop: start=0, step=1, limit=4
    $region2: #{tpu_custom_call.1} parent=1 // loop_pre_header
      _
    $region3: #{tpu_custom_call.1} parent=1 // loop_header
      %s20 = sphi 0, %s24
      %p21 = scmp.ge.s32.totalorder %s20, 4
      %s30 = sphi 0, %s32
      %s33 = sphi 0, %s30
      %s34 = sphi 0, %s33
      %s50 = sphi 0, %s34
      %s56 = sphi 0, %s58
      %s59 = sphi 0, %s56
      %s60 = sphi 0, %s59
      %s76 = sphi 0, %s60
      %s80 = sphi 0, %s80
      %s82 = sphi 0, %s80
      %s83 = sphi 0, %s82
      %s97 = sphi 0, %s83
      %s101 = sphi 0, %s101
      %s103 = sphi 0, %s101
      %s104 = sphi 0, %s103
      %s118 = sphi 0, %s104
      %s122 = sphi 0, %s122
      %s124 = sphi 0, %s122
      %s125 = sphi 0, %s124
      %s139 = sphi 0, %s125
      %s145 = sphi 0, %s147
      %s148 = sphi 0, %s145
      %s149 = sphi 0, %s148
      %s165 = sphi 0, %s149
    $region4: #{tpu_custom_call.1} parent=1 // loop_header_branch
      %23 = sbr.rel (%p21) target = $region8
    $region5: #{tpu_custom_call.1} parent=1 // loop_body
      %s25 = ssub.s32 %s20, 1
      %s26 = ssub.s32 %s20, 2
      %s27 = sadd.s32 %s20, 1
      %s28 = ssub.s32 %s20, %s27
      %p29 = scmp.eq.s32.totalorder %s28, 0
      %s31 = sadd.s32 %s30, 1
      %s32 = scalar_select %p29, %s30, %s31
      %p35 = pneg %p29
      %p36 = scmp.eq.s32.totalorder %s20, 1
      %p37 = por %p35, %p36
      %p38 = scmp.ne.s32.totalorder %s30, %s33
      %p39 = scmp.eq.s32.totalorder %s20, 0
      %p40 = por %p38, %p39
      %p41 = scmp.ne.s32.totalorder %s30, %s33
      %p42 = scmp.eq.s32.totalorder %s25, 1
      %p43 = por %p41, %p42
      %p44 = scmp.ne.s32.totalorder %s33, %s34
      %p45 = scmp.eq.s32.totalorder %s25, 0
      %p46 = por %p44, %p45
      %p47 = scmp.ne.s32.totalorder %s33, %s34
      %p48 = scmp.eq.s32.totalorder %s26, 1
      %p49 = por %p47, %p48
      %p51 = scmp.ne.s32.totalorder %s34, %s50
      %p52 = scmp.eq.s32.totalorder %s26, 0
      %p53 = por %p51, %p52
      %s54 = ssub.s32 %s20, %s27
      %p55 = scmp.eq.s32.totalorder %s54, 0
      %s57 = sadd.s32 %s56, 1
      %s58 = scalar_select %p55, %s56, %s57
      %p61 = pneg %p55
      %p62 = scmp.eq.s32.totalorder %s20, 1
      %p63 = por %p61, %p62
      %p64 = scmp.ne.s32.totalorder %s56, %s59
      %p65 = scmp.eq.s32.totalorder %s20, 0
      %p66 = por %p64, %p65
      %p67 = scmp.ne.s32.totalorder %s56, %s59
      %p68 = scmp.eq.s32.totalorder %s25, 1
      %p69 = por %p67, %p68
      %p70 = scmp.ne.s32.totalorder %s59, %s60
      %p71 = scmp.eq.s32.totalorder %s25, 0
      %p72 = por %p70, %p71
      %p73 = scmp.ne.s32.totalorder %s59, %s60
      %p74 = scmp.eq.s32.totalorder %s26, 1
      %p75 = por %p73, %p74
      %p77 = scmp.ne.s32.totalorder %s60, %s76
      %p78 = scmp.eq.s32.totalorder %s26, 0
      %p79 = por %p77, %p78
      %s81 = sadd.s32 %s80, 1
      %p84 = scmp.eq.s32.totalorder %s20, 1
      %p85 = scmp.ne.s32.totalorder %s80, %s82
      %p86 = scmp.eq.s32.totalorder %s20, 0
      %p87 = por %p85, %p86
      %p88 = scmp.ne.s32.totalorder %s80, %s82
      %p89 = scmp.eq.s32.totalorder %s25, 1
      %p90 = por %p88, %p89
      %p91 = scmp.ne.s32.totalorder %s82, %s83
      %p92 = scmp.eq.s32.totalorder %s25, 0
      %p93 = por %p91, %p92
      %p94 = scmp.ne.s32.totalorder %s82, %s83
      %p95 = scmp.eq.s32.totalorder %s26, 1
      %p96 = por %p94, %p95
      %p98 = scmp.ne.s32.totalorder %s83, %s97
      %p99 = scmp.eq.s32.totalorder %s26, 0
      %p100 = por %p98, %p99
      %s102 = sadd.s32 %s101, 1
      %p105 = scmp.eq.s32.totalorder %s20, 1
      %p106 = scmp.ne.s32.totalorder %s101, %s103
      %p107 = scmp.eq.s32.totalorder %s20, 0
      %p108 = por %p106, %p107
      %p109 = scmp.ne.s32.totalorder %s101, %s103
      %p110 = scmp.eq.s32.totalorder %s25, 1
      %p111 = por %p109, %p110
      %p112 = scmp.ne.s32.totalorder %s103, %s104
      %p113 = scmp.eq.s32.totalorder %s25, 0
      %p114 = por %p112, %p113
      %p115 = scmp.ne.s32.totalorder %s103, %s104
      %p116 = scmp.eq.s32.totalorder %s26, 1
      %p117 = por %p115, %p116
      %p119 = scmp.ne.s32.totalorder %s104, %s118
      %p120 = scmp.eq.s32.totalorder %s26, 0
      %p121 = por %p119, %p120
      %s123 = sadd.s32 %s122, 1
      %p126 = scmp.eq.s32.totalorder %s20, 1
      %p127 = scmp.ne.s32.totalorder %s122, %s124
      %p128 = scmp.eq.s32.totalorder %s20, 0
      %p129 = por %p127, %p128
      %p130 = scmp.ne.s32.totalorder %s122, %s124
      %p131 = scmp.eq.s32.totalorder %s25, 1
      %p132 = por %p130, %p131
      %p133 = scmp.ne.s32.totalorder %s124, %s125
      %p134 = scmp.eq.s32.totalorder %s25, 0
      %p135 = por %p133, %p134
      %p136 = scmp.ne.s32.totalorder %s124, %s125
      %p137 = scmp.eq.s32.totalorder %s26, 1
      %p138 = por %p136, %p137
      %p140 = scmp.ne.s32.totalorder %s125, %s139
      %p141 = scmp.eq.s32.totalorder %s26, 0
      %p142 = por %p140, %p141
      %s143 = ssub.s32 %s20, %s27
      %p144 = scmp.eq.s32.totalorder %s143, 0
      %s146 = sadd.s32 %s145, 1
      %s147 = scalar_select %p144, %s145, %s146
      %p150 = pneg %p144
      %p151 = scmp.eq.s32.totalorder %s20, 1
      %p152 = por %p150, %p151
      %p153 = scmp.ne.s32.totalorder %s145, %s148
      %p154 = scmp.eq.s32.totalorder %s20, 0
      %p155 = por %p153, %p154
      %p156 = scmp.ne.s32.totalorder %s145, %s148
      %p157 = scmp.eq.s32.totalorder %s25, 1
      %p158 = por %p156, %p157
      %p159 = scmp.ne.s32.totalorder %s148, %s149
      %p160 = scmp.eq.s32.totalorder %s25, 0
      %p161 = por %p159, %p160
      %p162 = scmp.ne.s32.totalorder %s148, %s149
      %p163 = scmp.eq.s32.totalorder %s26, 1
      %p164 = por %p162, %p163
      %p166 = scmp.ne.s32.totalorder %s149, %s165
      %p167 = scmp.eq.s32.totalorder %s26, 0
      %p168 = por %p166, %p167
      %p169 = scmp.le.s32.totalorder 1, %s20
      %p170 = scmp.lt.s32.totalorder %s20, 3
      %p171 = pnand %p169, %p170
      %p172 = pneg %p171
      // Predicated region
      $region9: #{tpu_custom_call.1} parent=5 // pred_check
        _
      $region10: #{tpu_custom_call.1} parent=5 // pred_check_branch
        %174 = sbr.rel (%p171) target = $region12
      $region11: #{tpu_custom_call.1} parent=5 // pred_region
        %s175 = ssub.s32 %s20, 1
        // Predicated region
        $region13: #{tpu_custom_call.1} parent=11 // pred_check
          %p176 = pneg %p93
        $region14: #{tpu_custom_call.1} parent=11 // pred_check_branch
          %178 = sbr.rel (%p176) target = $region16
        $region15: #{tpu_custom_call.1} parent=11 // pred_region
          _
        $region16: #{tpu_custom_call.1} parent=11 // pred_fallthru
          _
        // Predicated region
        $region17: #{tpu_custom_call.1} parent=11 // pred_check
          %p179 = pneg %p114
        $region18: #{tpu_custom_call.1} parent=11 // pred_check_branch
          %181 = sbr.rel (%p179) target = $region20
        $region19: #{tpu_custom_call.1} parent=11 // pred_region
          %s183 = ssub.s32 2048, 2048
          %184 = vsyncadd [#allocation6], %s183
          %s185 = sshll.u32 [#allocation7], 4
          %s186 = int_to_ptr.vmem [resolvable:$true] %s185
          %191 = dma.hbm_to_vmem [thread:$0]  %s3, 2048, %s186, [#allocation6], 128, 128, 8
        $region20: #{tpu_custom_call.1} parent=11 // pred_fallthru
          _
        // Predicated region
        $region21: #{tpu_custom_call.1} parent=11 // pred_check
          %p192 = pneg %p135
        $region22: #{tpu_custom_call.1} parent=11 // pred_check_branch
          %194 = sbr.rel (%p192) target = $region24
        $region23: #{tpu_custom_call.1} parent=11 // pred_region
          _
        $region24: #{tpu_custom_call.1} parent=11 // pred_fallthru
          _
      $region12: #{tpu_custom_call.1} parent=5 // pred_fallthru
        _
      %p195 = scmp.lt.s32.totalorder %s20, 2
      // Predicated region
      $region25: #{tpu_custom_call.1} parent=5 // pred_check
        %p196 = pneg %p195
      $region26: #{tpu_custom_call.1} parent=5 // pred_check_branch
        %198 = sbr.rel (%p196) target = $region28
      $region27: #{tpu_custom_call.1} parent=5 // pred_region
        // Predicated region
        $region29: #{tpu_custom_call.1} parent=27 // pred_check
          %p199 = pneg %p40
        $region30: #{tpu_custom_call.1} parent=27 // pred_check_branch
          %201 = sbr.rel (%p199) target = $region32
        $region31: #{tpu_custom_call.1} parent=27 // pred_region
          %s202 = sand.u32 %s30, 1
          %s203 = scalar_lea.sflag [#allocation3], %s202
          %s204 = sand.u32 %s30, 1
          %s205 = smul.addr %s204, 16
          %s206 = scalar_lea.vmem [#allocation2], %s205
          %s208 = ssub.s32 256, 256
          %209 = vsyncadd %s203, %s208
          %s210 = smul.addr %s20, 2
          %s211 = smul.addr %s210, 128
          %s212 = scalar_lea.hbm %s0, %s211
          %s213 = sshll.u32 %s206, 4
          %s214 = int_to_ptr.vmem [resolvable:$true] %s213
          %219 = dma.hbm_to_vmem [thread:$0]  %s212, 256, %s214, %s203, 128, 128, 8
        $region32: #{tpu_custom_call.1} parent=27 // pred_fallthru
          _
        // Predicated region
        $region33: #{tpu_custom_call.1} parent=27 // pred_check
          %p220 = pneg %p66
        $region34: #{tpu_custom_call.1} parent=27 // pred_check_branch
          %222 = sbr.rel (%p220) target = $region36
        $region35: #{tpu_custom_call.1} parent=27 // pred_region
          %s223 = sand.u32 %s20, 1
          %s224 = scalar_lea.sflag [#allocation6], %s223
          %s225 = sand.u32 %s56, 1
          %s226 = smul.addr %s225, 16
          %s227 = scalar_lea.vmem [#allocation5], %s226
          %s229 = ssub.s32 256, 256
          %230 = vsyncadd %s224, %s229
          %s231 = smul.addr %s20, 2
          %s232 = smul.addr %s231, 128
          %s233 = scalar_lea.hbm %s1, %s232
          %s234 = sshll.u32 %s227, 4
          %s235 = int_to_ptr.vmem [resolvable:$true] %s234
          %240 = dma.hbm_to_vmem [thread:$0]  %s233, 256, %s235, %s224, 128, 128, 8
        $region36: #{tpu_custom_call.1} parent=27 // pred_fallthru
          _
      $region28: #{tpu_custom_call.1} parent=5 // pred_fallthru
        _
      %p241 = scmp.le.s32.totalorder 1, %s20
      %p242 = scmp.lt.s32.totalorder %s20, 3
      %p243 = pnand %p241, %p242
      %p244 = pneg %p243
      // Predicated region
      $region37: #{tpu_custom_call.1} parent=5 // pred_check
        _
      $region38: #{tpu_custom_call.1} parent=5 // pred_check_branch
        %246 = sbr.rel (%p243) target = $region40
      $region39: #{tpu_custom_call.1} parent=5 // pred_region
        %s247 = ssub.s32 %s20, 1
        %s248 = sand.u32 %s33, 1
        %s249 = scalar_lea.sflag [#allocation3], %s248
        %s250 = sand.u32 %s33, 1
        %s251 = smul.addr %s250, 16
        %s252 = scalar_lea.vmem [#allocation2], %s251
        // Predicated region
        $region41: #{tpu_custom_call.1} parent=39 // pred_check
          %p253 = pneg %p46
        $region42: #{tpu_custom_call.1} parent=39 // pred_check_branch
          %255 = sbr.rel (%p253) target = $region44
        $region43: #{tpu_custom_call.1} parent=39 // pred_region
          %256 = dma.done %s249, 256
        $region44: #{tpu_custom_call.1} parent=39 // pred_fallthru
          _
        %s257 = sand.u32 %s25, 1
        %s258 = scalar_lea.sflag [#allocation6], %s257
        %s259 = sand.u32 %s59, 1
        %s260 = smul.addr %s259, 16
        %s261 = scalar_lea.vmem [#allocation5], %s260
        // Predicated region
        $region45: #{tpu_custom_call.1} parent=39 // pred_check
          %p262 = pneg %p72
        $region46: #{tpu_custom_call.1} parent=39 // pred_check_branch
          %264 = sbr.rel (%p262) target = $region48
        $region47: #{tpu_custom_call.1} parent=39 // pred_region
          %265 = dma.done %s258, 256
        $region48: #{tpu_custom_call.1} parent=39 // pred_fallthru
          _
        // Predicated region
        $region49: #{tpu_custom_call.1} parent=39 // pred_check
          %p266 = pneg %p114
        $region50: #{tpu_custom_call.1} parent=39 // pred_check_branch
          %268 = sbr.rel (%p266) target = $region52
        $region51: #{tpu_custom_call.1} parent=39 // pred_region
          %269 = dma.done [#allocation6], 2048
        $region52: #{tpu_custom_call.1} parent=39 // pred_fallthru
          _
        %s270 = sand.u32 %s33, 1
        %s271 = scalar_lea.sflag [#allocation3], %s270
        %s272 = sand.u32 %s33, 1
        %s273 = smul.addr %s272, 16
        %s274 = scalar_lea.vmem [#allocation2], %s273
        %p275 = pneg %p46
        %p276 = pneg %p43
        %s277 = sand.u32 %s25, 1
        %s278 = scalar_lea.sflag [#allocation6], %s277
        %s279 = sand.u32 %s59, 1
        %s280 = smul.addr %s279, 16
        %s281 = scalar_lea.vmem [#allocation5], %s280
        %p282 = pneg %p72
        %p283 = pneg %p69
        %p284 = pneg %p93
        %p285 = pneg %p90
        %p286 = pneg %p114
        %p287 = pneg %p111
        %p288 = pneg %p135
        %p289 = pneg %p132
        %p290 = pneg %p161
        %p291 = pneg %p158
        %s292 = sand.u32 %s148, 1
        %s293 = scalar_lea.sflag [#allocation4], %s292
        %s294 = sand.u32 %s148, 1
        %s295 = smul.addr %s294, 16
        %s296 = scalar_lea.vmem [#allocation8], %s295
        %v297 = vld [vmem:[%s252] sm:$0xff]
        %v298 = vld [vmem:[%s252 + $0x8] sm:$0xff]
        %v299 = vld [vmem:[%s261] sm:$0xff]
        %v300 = vld [vmem:[%s261 + $0x8] sm:$0xff]
        %vm301 = vcmask 130048
        %v303 = vsel %vm301, %v297, 0
        %v306 = vsel %vm301, %v298, 0
        %308 = vmatprep.subr.mxu0 0.0
        %309 = vmatpush1.msra.mxu0 %v299
        %310 = vmatprep.subr.mxu0 0.0
        %311 = vmatpush1.msra.mxu0 %v300
        %312 = vmatprep.subr.mxu0 0.0
        %313 = vmatpush1.msra.mxu0 0.0
        %314 = vmatprep.subr.mxu0 0.0
        %315 = vmatpush1.msra.mxu0 0.0
        %316 = vmatprep.subr.mxu0 0.0
        %317 = vmatpush1.msra.mxu0 0.0
        %318 = vmatprep.subr.mxu0 0.0
        %319 = vmatpush1.msra.mxu0 0.0
        %320 = vmatprep.subr.mxu0 0.0
        %321 = vmatpush1.msra.mxu0 0.0
        %322 = vmatprep.subr.mxu0 0.0
        %323 = vmatpush1.msra.mxu0 0.0
        %324 = vmatprep.subr.mxu0 0.0
        %325 = vmatpush1.msra.mxu0 0.0
        %326 = vmatprep.subr.mxu0 0.0
        %327 = vmatpush1.msra.mxu0 0.0
        %328 = vmatprep.subr.mxu0 0.0
        %329 = vmatpush1.msra.mxu0 0.0
        %330 = vmatprep.subr.mxu0 0.0
        %331 = vmatpush1.msra.mxu0 0.0
        %332 = vmatprep.subr.mxu0 0.0
        %333 = vmatpush1.msra.mxu0 0.0
        %334 = vmatprep.subr.mxu0 0.0
        %335 = vmatpush1.msra.mxu0 0.0
        %336 = vmatprep.subr.mxu0 0.0
        %337 = vmatpush1.msra.mxu0 0.0
        %338 = vmatprep.subr.mxu0 0.0
        %339 = vmatpush1.msra.mxu0 0.0
        %340 = vmatprep.subr.mxu0 0.0
        %341 = vmatpush1.msra.mxu0 0.0
        %342 = vmatprep.subr.mxu0 0.0
        %343 = vmatpush1.msra.mxu0 0.0
        %344 = vmatprep.subr.mxu0 0.0
        %345 = vmatpush1.msra.mxu0 0.0
        %346 = vmatprep.subr.mxu0 0.0
        %347 = vmatpush1.msra.mxu0 0.0
        %348 = vmatprep.subr.mxu0 0.0
        %349 = vmatpush1.msra.mxu0 0.0
        %350 = vmatprep.subr.mxu0 0.0
        %351 = vmatpush1.msra.mxu0 0.0
        %352 = vmatprep.subr.mxu0 0.0
        %353 = vmatpush1.msra.mxu0 0.0
        %354 = vmatprep.subr.mxu0 0.0
        %355 = vmatpush1.msra.mxu0 0.0
        %356 = vmatprep.subr.mxu0 0.0
        %357 = vmatpush1.msra.mxu0 0.0
        %358 = vmatprep.subr.mxu0 0.0
        %359 = vmatpush1.msra.mxu0 0.0
        %360 = vmatprep.subr.mxu0 0.0
        %361 = vmatpush1.msra.mxu0 0.0
        %362 = vmatprep.subr.mxu0 0.0
        %363 = vmatpush1.msra.mxu0 0.0
        %364 = vmatprep.subr.mxu0 0.0
        %365 = vmatpush1.msra.mxu0 0.0
        %366 = vmatprep.subr.mxu0 0.0
        %367 = vmatpush1.msra.mxu0 0.0
        %368 = vmatprep.subr.mxu0 0.0
        %369 = vmatpush1.msra.mxu0 0.0
        %370 = vmatprep.subr.mxu0 0.0
        %371 = vmatpush1.msra.mxu0 0.0
        %372 = vmatprep.mubr.f32.mxu0 0.0
        %373 = vmatmul.mubr.f32.gmra.mrb[0].mxu0 %v303
        %v374 = vpop.f32.mrb[0].mxu0
        %v375 = vadd.f32 0.0, %v374
        %v376 = vpop.f32.mrb[0].mxu0
        %377 = vmatprep.mubr.f32.mxu0 0.0
        %378 = vmatmul.mubr.f32.gmra.mrb[0].mxu0 %v306
        %v379 = vpop.f32.mrb[0].mxu0
        %v380 = vadd.f32 0.0, %v379
        %v381 = vpop.f32.mrb[0].mxu0
        %382 = vdwg.mxu0
        %v383 = vadd.f32 %v375, 1e-06
        %v384 = vadd.f32 %v380, 1e-06
        %v385 = vrcp.pop %v383
        %v386 = vrcp.pop %v384
        %388 = vset.pattern.permute.xlu0 32
        %389 = vperm.xlu0 %388, %v385
        %v390 = vpop.permute.xlu0 %389
        %393 = vset.pattern.permute.xlu0 32
        %394 = vperm.xlu0 %393, %v386
        %v395 = vpop.permute.xlu0 %394
        %v397 = vmul.f32 %v375, %v390
        %v398 = vmul.f32 %v380, %v395
        %v399 = vld [vmem:[%s2] sm:$0x1]
        %v401 = vlaneseq
        %v402 = vshrl.u32 %v401, 7
        %v403 = vsub.s32 0, %v402
        %v404 = vrot.slane %v399, %v403
        %v406 = vadd.f32 %v397, %v404
        %v407 = vadd.f32 %v398, %v404
        %v408 = vmax.f32 %v406, 0.0
        %v409 = vmax.f32 %v407, 0.0
        %v410 = vld [vmem:[#allocation7] sm:$0xff]
        %v411 = vld [vmem:[#allocation7 + $0x8] sm:$0xff]
        %v412 = vld [vmem:[#allocation7 + $0x10] sm:$0xff]
        %v413 = vld [vmem:[#allocation7 + $0x18] sm:$0xff]
        %v414 = vld [vmem:[#allocation7 + $0x20] sm:$0xff]
        %v415 = vld [vmem:[#allocation7 + $0x28] sm:$0xff]
        %v416 = vld [vmem:[#allocation7 + $0x30] sm:$0xff]
        %v417 = vld [vmem:[#allocation7 + $0x38] sm:$0xff]
        %v418 = vld [vmem:[#allocation7 + $0x40] sm:$0xff]
        %v419 = vld [vmem:[#allocation7 + $0x48] sm:$0xff]
        %v420 = vld [vmem:[#allocation7 + $0x50] sm:$0xff]
        %v421 = vld [vmem:[#allocation7 + $0x58] sm:$0xff]
        %v422 = vld [vmem:[#allocation7 + $0x60] sm:$0xff]
        %v423 = vld [vmem:[#allocation7 + $0x68] sm:$0xff]
        %v424 = vld [vmem:[#allocation7 + $0x70] sm:$0xff]
        %v425 = vld [vmem:[#allocation7 + $0x78] sm:$0xff]
        %426 = vmatprep.subr.mxu0 0.0
        %427 = vmatpush1.msra.mxu0 %v410
        %428 = vmatprep.subr.mxu0 0.0
        %429 = vmatpush1.msra.mxu0 %v411
        %430 = vmatprep.subr.mxu0 0.0
        %431 = vmatpush1.msra.mxu0 %v412
        %432 = vmatprep.subr.mxu0 0.0
        %433 = vmatpush1.msra.mxu0 %v413
        %434 = vmatprep.subr.mxu0 0.0
        %435 = vmatpush1.msra.mxu0 %v414
        %436 = vmatprep.subr.mxu0 0.0
        %437 = vmatpush1.msra.mxu0 %v415
        %438 = vmatprep.subr.mxu0 0.0
        %439 = vmatpush1.msra.mxu0 %v416
        %440 = vmatprep.subr.mxu0 0.0
        %441 = vmatpush1.msra.mxu0 %v417
        %442 = vmatprep.subr.mxu0 0.0
        %443 = vmatpush1.msra.mxu0 %v418
        %444 = vmatprep.subr.mxu0 0.0
        %445 = vmatpush1.msra.mxu0 %v419
        %446 = vmatprep.subr.mxu0 0.0
        %447 = vmatpush1.msra.mxu0 %v420
        %448 = vmatprep.subr.mxu0 0.0
        %449 = vmatpush1.msra.mxu0 %v421
        %450 = vmatprep.subr.mxu0 0.0
        %451 = vmatpush1.msra.mxu0 %v422
        %452 = vmatprep.subr.mxu0 0.0
        %453 = vmatpush1.msra.mxu0 %v423
        %454 = vmatprep.subr.mxu0 0.0
        %455 = vmatpush1.msra.mxu0 %v424
        %456 = vmatprep.subr.mxu0 0.0
        %457 = vmatpush1.msra.mxu0 %v425
        %458 = vmatprep.subr.mxu0 0.0
        %459 = vmatpush1.msra.mxu0 0.0
        %460 = vmatprep.subr.mxu0 0.0
        %461 = vmatpush1.msra.mxu0 0.0
        %462 = vmatprep.subr.mxu0 0.0
        %463 = vmatpush1.msra.mxu0 0.0
        %464 = vmatprep.subr.mxu0 0.0
        %465 = vmatpush1.msra.mxu0 0.0
        %466 = vmatprep.subr.mxu0 0.0
        %467 = vmatpush1.msra.mxu0 0.0
        %468 = vmatprep.subr.mxu0 0.0
        %469 = vmatpush1.msra.mxu0 0.0
        %470 = vmatprep.subr.mxu0 0.0
        %471 = vmatpush1.msra.mxu0 0.0
        %472 = vmatprep.subr.mxu0 0.0
        %473 = vmatpush1.msra.mxu0 0.0
        %474 = vmatprep.subr.mxu0 0.0
        %475 = vmatpush1.msra.mxu0 0.0
        %476 = vmatprep.subr.mxu0 0.0
        %477 = vmatpush1.msra.mxu0 0.0
        %478 = vmatprep.subr.mxu0 0.0
        %479 = vmatpush1.msra.mxu0 0.0
        %480 = vmatprep.subr.mxu0 0.0
        %481 = vmatpush1.msra.mxu0 0.0
        %482 = vmatprep.subr.mxu0 0.0
        %483 = vmatpush1.msra.mxu0 0.0
        %484 = vmatprep.subr.mxu0 0.0
        %485 = vmatpush1.msra.mxu0 0.0
        %486 = vmatprep.subr.mxu0 0.0
        %487 = vmatpush1.msra.mxu0 0.0
        %488 = vmatprep.subr.mxu0 0.0
        %489 = vmatpush1.msra.mxu0 0.0
        %490 = vmatprep.mubr.f32.mxu0 0.0
        %491 = vmatmul.mubr.f32.gmra.mrb[0].mxu0 %v408
        %v492 = vpop.f32.mrb[0].mxu0
        %v493 = vadd.f32 0.0, %v492
        %v494 = vpop.f32.mrb[0].mxu0
        %495 = vmatprep.mubr.f32.mxu0 0.0
        %496 = vmatmul.mubr.f32.gmra.mrb[0].mxu0 %v409
        %v497 = vpop.f32.mrb[0].mxu0
        %v498 = vadd.f32 0.0, %v497
        %v499 = vpop.f32.mrb[0].mxu0
        %500 = vdwg.mxu0
        %501 = vmatprep.subr.mxu0 0.0
        %502 = vmatpush1.msra.mxu0 %v493
        %503 = vmatprep.subr.mxu0 0.0
        %504 = vmatpush1.msra.mxu0 %v498
        %505 = vmatprep.subr.mxu0 0.0
        %506 = vmatpush1.msra.mxu0 0.0
        %507 = vmatprep.subr.mxu0 0.0
        %508 = vmatpush1.msra.mxu0 0.0
        %509 = vmatprep.subr.mxu0 0.0
        %510 = vmatpush1.msra.mxu0 0.0
        %511 = vmatprep.subr.mxu0 0.0
        %512 = vmatpush1.msra.mxu0 0.0
        %513 = vmatprep.subr.mxu0 0.0
        %514 = vmatpush1.msra.mxu0 0.0
        %515 = vmatprep.subr.mxu0 0.0
        %516 = vmatpush1.msra.mxu0 0.0
        %517 = vmatprep.subr.mxu0 0.0
        %518 = vmatpush1.msra.mxu0 0.0
        %519 = vmatprep.subr.mxu0 0.0
        %520 = vmatpush1.msra.mxu0 0.0
        %521 = vmatprep.subr.mxu0 0.0
        %522 = vmatpush1.msra.mxu0 0.0
        %523 = vmatprep.subr.mxu0 0.0
        %524 = vmatpush1.msra.mxu0 0.0
        %525 = vmatprep.subr.mxu0 0.0
        %526 = vmatpush1.msra.mxu0 0.0
        %527 = vmatprep.subr.mxu0 0.0
        %528 = vmatpush1.msra.mxu0 0.0
        %529 = vmatprep.subr.mxu0 0.0
        %530 = vmatpush1.msra.mxu0 0.0
        %531 = vmatprep.subr.mxu0 0.0
        %532 = vmatpush1.msra.mxu0 0.0
        %533 = vmatprep.subr.mxu0 0.0
        %534 = vmatpush1.msra.mxu0 0.0
        %535 = vmatprep.subr.mxu0 0.0
        %536 = vmatpush1.msra.mxu0 0.0
        %537 = vmatprep.subr.mxu0 0.0
        %538 = vmatpush1.msra.mxu0 0.0
        %539 = vmatprep.subr.mxu0 0.0
        %540 = vmatpush1.msra.mxu0 0.0
        %541 = vmatprep.subr.mxu0 0.0
        %542 = vmatpush1.msra.mxu0 0.0
        %543 = vmatprep.subr.mxu0 0.0
        %544 = vmatpush1.msra.mxu0 0.0
        %545 = vmatprep.subr.mxu0 0.0
        %546 = vmatpush1.msra.mxu0 0.0
        %547 = vmatprep.subr.mxu0 0.0
        %548 = vmatpush1.msra.mxu0 0.0
        %549 = vmatprep.subr.mxu0 0.0
        %550 = vmatpush1.msra.mxu0 0.0
        %551 = vmatprep.subr.mxu0 0.0
        %552 = vmatpush1.msra.mxu0 0.0
        %553 = vmatprep.subr.mxu0 0.0
        %554 = vmatpush1.msra.mxu0 0.0
        %555 = vmatprep.subr.mxu0 0.0
        %556 = vmatpush1.msra.mxu0 0.0
        %557 = vmatprep.subr.mxu0 0.0
        %558 = vmatpush1.msra.mxu0 0.0
        %559 = vmatprep.subr.mxu0 0.0
        %560 = vmatpush1.msra.mxu0 0.0
        %561 = vmatprep.subr.mxu0 0.0
        %562 = vmatpush1.msra.mxu0 0.0
        %563 = vmatprep.subr.mxu0 0.0
        %564 = vmatpush1.msra.mxu0 0.0
        %565 = vmatprep.mubr.f32.mxu0 0.0
        %566 = vmatmul.mubr.f32.gmra.mrb[0].mxu0 %v303
        %v567 = vpop.f32.mrb[0].mxu0
        %v568 = vadd.f32 0.0, %v567
        %v569 = vpop.f32.mrb[0].mxu0
        %570 = vmatprep.mubr.f32.mxu0 0.0
        %571 = vmatmul.mubr.f32.gmra.mrb[0].mxu0 %v306
        %v572 = vpop.f32.mrb[0].mxu0
        %v573 = vadd.f32 0.0, %v572
        %v574 = vpop.f32.mrb[0].mxu0
        %575 = vdwg.mxu0
        %v576 = vmul.f32 %v568, %v390
        %v577 = vmul.f32 %v573, %v395
        %v578 = vld [vmem:[%s4] sm:$0x1]
        %v580 = vlaneseq
        %v581 = vshrl.u32 %v580, 7
        %v582 = vsub.s32 0, %v581
        %v583 = vrot.slane %v578, %v582
        %v585 = vadd.f32 %v576, %v583
        %v586 = vadd.f32 %v577, %v583
        %v587 = vmax.f32 %v585, 0.0
        %v588 = vmax.f32 %v586, 0.0
        %589 = vst [vmem:[%s296] sm:$0xff] %v587
        %590 = vst [vmem:[%s296 + $0x8] sm:$0xff] %v588
        %s591 = sand.u32 %s148, 1
        %s592 = scalar_lea.sflag [#allocation4], %s591
        %s593 = sand.u32 %s148, 1
        %s594 = smul.addr %s593, 16
        %s595 = scalar_lea.vmem [#allocation8], %s594
        // Predicated region
        $region53: #{tpu_custom_call.1} parent=39 // pred_check
          %p596 = pneg %p158
        $region54: #{tpu_custom_call.1} parent=39 // pred_check_branch
          %598 = sbr.rel (%p596) target = $region56
        $region55: #{tpu_custom_call.1} parent=39 // pred_region
          %s600 = ssub.s32 256, 256
          %601 = vsyncadd %s592, %s600
          %s602 = smul.addr %s25, 2
          %s603 = smul.addr %s602, 128
          %s604 = scalar_lea.hbm %s5, %s603
          %s605 = sshll.u32 %s595, 4
          %s606 = int_to_ptr.vmem [resolvable:$true] %s605
          %611 = dma.vmem_to_hbm [thread:$0]  %s606, 256, %s604, %s592, 128, 128, 8
        $region56: #{tpu_custom_call.1} parent=39 // pred_fallthru
          _
      $region40: #{tpu_custom_call.1} parent=5 // pred_fallthru
        _
      %p612 = scmp.le.s32.totalorder 2, %s20
      // Predicated region
      $region57: #{tpu_custom_call.1} parent=5 // pred_check
        %p613 = pneg %p612
      $region58: #{tpu_custom_call.1} parent=5 // pred_check_branch
        %615 = sbr.rel (%p613) target = $region60
      $region59: #{tpu_custom_call.1} parent=5 // pred_region
        %s616 = ssub.s32 %s20, 2
        // Predicated region
        $region61: #{tpu_custom_call.1} parent=59 // pred_check
          %p617 = pneg %p164
        $region62: #{tpu_custom_call.1} parent=59 // pred_check_branch
          %619 = sbr.rel (%p617) target = $region64
        $region63: #{tpu_custom_call.1} parent=59 // pred_region
          %s620 = sand.u32 %s149, 1
          %s621 = scalar_lea.sflag [#allocation4], %s620
          %s622 = sand.u32 %s149, 1
          %s623 = smul.addr %s622, 16
          %s624 = scalar_lea.vmem [#allocation8], %s623
          %625 = dma.done %s621, 256
        $region64: #{tpu_custom_call.1} parent=59 // pred_fallthru
          _
      $region60: #{tpu_custom_call.1} parent=5 // pred_fallthru
        _
    $region6: #{tpu_custom_call.1} parent=1 // loop_footer
      %s24 = sadd.s32 1, %s20
    $region7: #{tpu_custom_call.1} parent=1 // loop_footer_branch
      %19 = sbr.rel target = $region3
    $region8: #{tpu_custom_call.1} parent=1 // loop_exit
      _
    %626 = vsyncpa [#allocation3], 1
    %s627 = scalar_lea.sflag [#allocation3], 1
    %628 = vsyncpa %s627, 1
    %629 = vsyncpa [#allocation6], 1
    %s630 = scalar_lea.sflag [#allocation6], 1
    %631 = vsyncpa %s630, 1
    %632 = vsyncpa [#allocation4], 1
    %s633 = scalar_lea.sflag [#allocation4], 1
    %634 = vsyncpa %s633, 1

</llo_original>
